<compile_context>
chip_gen: v7x
topology: tpu7x:2x2x1
jax: 0.10.0
libtpu: 0.0.40
codegen_flags: <defaults>
</compile_context>

<pallas_src>
import math
import jax
import jax.numpy as jnp
import numpy as np
from jax.experimental import pallas as pl
from jax.experimental.pallas import tpu as pltpu


def adjbigcn_kernel(mx_ref, adj_ref, sup_self_ref, sup_flow_ref, bcat_ref,
                    wh_ref, bh_ref, out_ref):
    # Two 64-wide spatial matmuls (bf16 x bf16 -> f32 accumulate) into one
    # (TILE_M, 64) slab.  sup_self is zero in its last `proportion` columns
    # and sup_flow is zero in its first `64 - proportion` columns, so the sum
    # exactly reproduces concat([adj @ (x@W_self), mx @ (x@W_flow)], axis=1).
    y = (jnp.dot(adj_ref[...], sup_self_ref[...],
                 preferred_element_type=jnp.float32)
         + jnp.dot(mx_ref[...], sup_flow_ref[...],
                   preferred_element_type=jnp.float32))
    h = jnp.maximum(y + bcat_ref[...], 0.0)          # relu(+ per-half bias)

    # Fused dense head: single (64, nout_padded) affine transform.
    out_ref[...] = (jnp.dot(h, wh_ref[...], preferred_element_type=jnp.float32)
                    + bh_ref[...])


def _round_up(a, b):
    return ((a + b - 1) // b) * b


def _vmem_capacity_bytes():
    """Physical VMEM per core (64 MiB on v7x, 128 MiB on v5e/v6e)."""
    try:
        return int(pltpu.get_tpu_info().vmem_capacity_bytes)
    except Exception:
        return 64 << 20            # conservative (v7x-safe) fallback


def _pick_tile_m(n_rows, n_cols, nout_p):
    """Largest row tile (multiple of 8, <=1024) that fits a generation-aware
    VMEM budget, counting double-buffered streamed blocks, the resident bf16
    supports, weights, and the double-buffered output block."""
    cap = _vmem_capacity_bytes()
    budget = int(cap * 0.72)                       # ~46 MiB v7x, ~92 MiB v5e/v6e

    # Blocks that do not scale with tile_m (all double-buffered by default).
    fixed = 2 * 2 * n_cols * 64 * 2                # sup_self_p + sup_flow_p (bf16)
    fixed += 2 * (64 * nout_p + 2 * nout_p + 64) * 4   # W_head, b_head, bcat
    fixed += 2 << 20                               # compiler scratch slack

    per_row = 2 * 2 * n_cols * 2                   # mx + adj rows, bf16, 2 bufs
    per_row += 2 * nout_p * 4                      # output block, f32, 2 bufs

    t = (budget - fixed) // per_row
    t = int(max(8, min(1024, t)))
    t = max(8, (t // 8) * 8)

    rows8 = _round_up(n_rows, 8)
    t = min(t, rows8)
    # Keep at least 2 grid steps so the "parallel" grid can use both v7x TCs.
    if t >= rows8 and rows8 > 8:
        t = max(8, _round_up((rows8 + 1) // 2, 8))
    return int(t)


def adjbigcn_forward(x, mx, adj, params, proportion, tile_m=None,
                     force_pallas=False):
    """x:(N,nfeat) mx:(N,N) adj:(N,N) -> (N,nout)."""
    N = x.shape[0]
    nout = params["layer3"].shape[1]
    n_self = 64 - proportion
    nout_p = max(128, _round_up(nout, 128))        # lane-dense output width

    # Small-N fast path: nothing to pipeline, XLA fuses this graph fine.
    if not force_pallas and 2 * N * N * 4 <= (16 << 20):
        return reference_forward(x, mx, adj, params)

    # ---- Hoisted, tile-invariant precompute (wrapper side, f32) -------------
    sup_self = jnp.dot(x, params["w_self"])                       # (N, n_self)
    sup_flow = jnp.dot(x, params["w_flow"])                       # (N, proportion)
    sup_self_p = jnp.concatenate(
        [sup_self, jnp.zeros((N, proportion), jnp.float32)], axis=1)
    sup_flow_p = jnp.concatenate(
        [jnp.zeros((N, n_self), jnp.float32), sup_flow], axis=1)
    sup_self_p = sup_self_p.astype(jnp.bfloat16)                  # (N, 64)
    sup_flow_p = sup_flow_p.astype(jnp.bfloat16)                  # (N, 64)
    bcat = jnp.concatenate([params["b_self"], params["b_flow"]]
                           ).reshape(1, 64).astype(jnp.float32)

    # Fused dense head (exact: no nonlinearity between layer1/2/3).
    w_head = params["layer1"] @ params["layer2"] @ params["layer3"]   # (64, nout)
    b_head = ((params["bias1"] @ params["layer2"] + params["bias2"])
              @ params["layer3"] + params["bias3"])                   # (nout,)
    w_head_p = jnp.zeros((64, nout_p), jnp.float32).at[:, :nout].set(w_head)
    b_head_p = jnp.zeros((1, nout_p), jnp.float32).at[0, :nout].set(b_head)

    # ---- Tiling / padding ----------------------------------------------------
    if tile_m is None:
        tile_m = _pick_tile_m(N, N, nout_p)
    tile_m = max(8, (int(tile_m) // 8) * 8)
    Np = _round_up(N, tile_m)

    mx_b = mx.astype(jnp.bfloat16)
    adj_b = adj.astype(jnp.bfloat16)
    if Np != N:
        mx_b = jnp.pad(mx_b, ((0, Np - N), (0, 0)))
        adj_b = jnp.pad(adj_b, ((0, Np - N), (0, 0)))

    grid = (Np // tile_m,)

    in_specs = [
        pl.BlockSpec((tile_m, N), lambda i: (i, 0)),    # mx rows (streamed, bf16)
        pl.BlockSpec((tile_m, N), lambda i: (i, 0)),    # adj rows (streamed, bf16)
        pl.BlockSpec((N, 64), lambda i: (0, 0)),        # sup_self (resident, bf16)
        pl.BlockSpec((N, 64), lambda i: (0, 0)),        # sup_flow (resident, bf16)
        pl.BlockSpec((1, 64), lambda i: (0, 0)),        # [b_self, b_flow]
        pl.BlockSpec((64, nout_p), lambda i: (0, 0)),   # fused head weight
        pl.BlockSpec((1, nout_p), lambda i: (0, 0)),    # fused head bias
    ]
    out_spec = pl.BlockSpec((tile_m, nout_p), lambda i: (i, 0))

    # Advisory cost (dominated by the two (Np, N) x (N, 64) spatial matmuls).
    flops = 2 * 2 * Np * N * 64 + 2 * Np * 64 * nout_p
    bytes_accessed = (2 * Np * N * 2            # bf16 mx/adj streams
                      + 2 * N * 64 * 2          # bf16 supports
                      + Np * nout_p * 4)        # output writeback
    cost = pl.CostEstimate(flops=int(flops), transcendentals=0,
                           bytes_accessed=int(bytes_accessed))

    # VMEM requirement: everything, double-buffered, plus slack; never clamp
    # below the requirement, never above physical capacity.
    cap = _vmem_capacity_bytes()
    required = (2 * 2 * tile_m * N * 2                 # streamed mx/adj blocks
                + 2 * 2 * N * 64 * 2                   # resident supports
                + 2 * (64 * nout_p + 2 * nout_p + 64) * 4   # weights/biases
                + 2 * tile_m * nout_p * 4              # output block
                + (2 << 20))                           # scratch slack
    vmem_limit = int(min(max(required, 16 << 20), int(cap * 0.98)))

    out = pl.pallas_call(
        adjbigcn_kernel,
        out_shape=jax.ShapeDtypeStruct((Np, nout_p), jnp.float32),
        grid=grid,
        in_specs=in_specs,
        out_specs=out_spec,
        compiler_params=pltpu.CompilerParams(
            dimension_semantics=("parallel",),
            vmem_limit_bytes=vmem_limit),
        cost_estimate=cost,
    )(mx_b, adj_b, sup_self_p, sup_flow_p, bcat, w_head_p, b_head_p)
    return out[:N, :nout]


def init_params(key, nfeat, nout, proportion):
    """Deterministic uniform(-stdv, stdv) init, mirroring reset_parameters."""
    ks = jax.random.split(key, 10)

    def u(k, shape, stdv):
        return jax.random.uniform(k, shape, jnp.float32, -stdv, stdv)

    n_self = 64 - proportion
    sf = 1.0 / math.sqrt(proportion)
    ss = 1.0 / math.sqrt(n_self)
    s1 = 1.0 / math.sqrt(32)
    s2 = 1.0 / math.sqrt(16)
    s3 = 1.0 / math.sqrt(nout)
    return dict(
        w_flow=u(ks[0], (nfeat, proportion), sf), b_flow=u(ks[1], (proportion,), sf),
        w_self=u(ks[2], (nfeat, n_self), ss),     b_self=u(ks[3], (n_self,), ss),
        layer1=u(ks[4], (64, 32), s1),            bias1=u(ks[5], (32,), s1),
        layer2=u(ks[6], (32, 16), s2),            bias2=u(ks[7], (16,), s2),
        layer3=u(ks[8], (16, nout), s3),          bias3=u(ks[9], (nout,), s3),
    )


def reference_forward(x, mx, adj, params):
    """Pure-JAX f32 reference of the PyTorch forward (eval mode)."""
    out_feat = jax.nn.relu(mx @ (x @ params["w_flow"]) + params["b_flow"])
    xs = jax.nn.relu(adj @ (x @ params["w_self"]) + params["b_self"])
    h = jnp.concatenate([xs, out_feat], axis=1)
    h = h @ params["layer1"] + params["bias1"]
    h = h @ params["layer2"] + params["bias2"]
    h = h @ params["layer3"] + params["bias3"]
    return h


if __name__ == "__main__":
    # Small shapes; N=36 is not a multiple of tile_m=16, so this exercises
    # row padding, lane padding of the nout=8 output, and a multi-step
    # (grid=(3,)) pipelined run.  force_pallas=True bypasses the small-N
    # pure-XLA fast path so the Pallas kernel itself is exercised.
    N, nfeat, nout, proportion = 36, 16, 8, 16
    key = jax.random.PRNGKey(0)
    kx, kmx, kadj, kp = jax.random.split(key, 4)

    x = jax.random.normal(kx, (N, nfeat), jnp.float32)
    mx = jax.random.uniform(kmx, (N, N), jnp.float32)
    adj = jax.random.uniform(kadj, (N, N), jnp.float32)
    params = init_params(kp, nfeat, nout, proportion)

    out = adjbigcn_forward(x, mx, adj, params, proportion,
                           tile_m=16, force_pallas=True)
    out = jax.block_until_ready(out)

    ref = reference_forward(x, mx, adj, params)
    # bf16 streaming of mx/adj + fused head => not bit-close to f32 reference.
    np.testing.assert_allclose(np.asarray(out), np.asarray(ref),
                               rtol=2e-2, atol=2e-2)
    print("KERNEL_OK")
</pallas_src>

<mosaic_0001>
module attributes {stable_mosaic.version = 11 : i64} {
  func.func @adjbigcn_kernel(%arg0: i32, %arg1: memref<16x36xbf16, #tpu.memory_space<vmem>>, %arg2: memref<16x36xbf16, #tpu.memory_space<vmem>>, %arg3: memref<36x64xbf16, #tpu.memory_space<vmem>>, %arg4: memref<36x64xbf16, #tpu.memory_space<vmem>>, %arg5: memref<1x64xf32, #tpu.memory_space<vmem>>, %arg6: memref<64x128xf32, #tpu.memory_space<vmem>>, %arg7: memref<1x128xf32, #tpu.memory_space<vmem>>, %arg8: memref<16x128xf32, #tpu.memory_space<vmem>>) attributes {dimension_semantics = [#tpu.dimension_semantics<parallel>], iteration_bounds = array<i64: 3>, scalar_prefetch = 0 : i64, scratch_operands = 0 : i64, tpu.core_type = #tpu.core_type<tc>, window_params = [{transform_indices = @transform_0, window_bounds = array<i64: 16, 36>}, {transform_indices = @transform_1, window_bounds = array<i64: 16, 36>}, {pipeline_mode = #tpu.pipeline_mode<synchronous>, transform_indices = @transform_2, window_bounds = array<i64: 36, 64>}, {pipeline_mode = #tpu.pipeline_mode<synchronous>, transform_indices = @transform_3, window_bounds = array<i64: 36, 64>}, {pipeline_mode = #tpu.pipeline_mode<synchronous>, transform_indices = @transform_4, window_bounds = array<i64: 1, 64>}, {pipeline_mode = #tpu.pipeline_mode<synchronous>, transform_indices = @transform_5, window_bounds = array<i64: 64, 128>}, {pipeline_mode = #tpu.pipeline_mode<synchronous>, transform_indices = @transform_6, window_bounds = array<i64: 1, 128>}, {transform_indices = @transform_7, window_bounds = array<i64: 16, 128>}]} {
    %c0 = arith.constant 0 : index
    %c0_0 = arith.constant 0 : index
    %0 = vector.load %arg2[%c0, %c0_0] : memref<16x36xbf16, #tpu.memory_space<vmem>>, vector<16x36xbf16>
    %c0_1 = arith.constant 0 : index
    %c0_2 = arith.constant 0 : index
    %1 = vector.load %arg3[%c0_1, %c0_2] : memref<36x64xbf16, #tpu.memory_space<vmem>>, vector<36x64xbf16>
    %cst = arith.constant dense<0.000000e+00> : vector<16x64xf32>
    %2 = tpu.matmul %0, %1, %cst {dimension_numbers = #tpu.dot_dimension_numbers<[1], [0], [0], [1], [0, 0, 1, 1], [], []>} : vector<16x36xbf16>, vector<36x64xbf16>, vector<16x64xf32> -> vector<16x64xf32>
    %c0_3 = arith.constant 0 : index
    %c0_4 = arith.constant 0 : index
    %3 = vector.load %arg1[%c0_3, %c0_4] : memref<16x36xbf16, #tpu.memory_space<vmem>>, vector<16x36xbf16>
    %c0_5 = arith.constant 0 : index
    %c0_6 = arith.constant 0 : index
    %4 = vector.load %arg4[%c0_5, %c0_6] : memref<36x64xbf16, #tpu.memory_space<vmem>>, vector<36x64xbf16>
    %cst_7 = arith.constant dense<0.000000e+00> : vector<16x64xf32>
    %5 = tpu.matmul %3, %4, %cst_7 {dimension_numbers = #tpu.dot_dimension_numbers<[1], [0], [0], [1], [0, 0, 1, 1], [], []>} : vector<16x36xbf16>, vector<36x64xbf16>, vector<16x64xf32> -> vector<16x64xf32>
    %6 = arith.addf %2, %5 : vector<16x64xf32>
    %c0_8 = arith.constant 0 : index
    %c0_9 = arith.constant 0 : index
    %7 = vector.load %arg5[%c0_8, %c0_9] : memref<1x64xf32, #tpu.memory_space<vmem>>, vector<1x64xf32>
    %8 = vector.broadcast %7 : vector<1x64xf32> to vector<16x64xf32>
    %9 = arith.addf %6, %8 : vector<16x64xf32>
    %cst_10 = arith.constant 0.000000e+00 : f32
    %10 = vector.broadcast %cst_10 : f32 to vector<16x64xf32>
    %11 = arith.maximumf %9, %10 : vector<16x64xf32>
    %c0_11 = arith.constant 0 : index
    %c0_12 = arith.constant 0 : index
    %12 = vector.load %arg6[%c0_11, %c0_12] : memref<64x128xf32, #tpu.memory_space<vmem>>, vector<64x128xf32>
    %cst_13 = arith.constant dense<0.000000e+00> : vector<16x128xf32>
    %13 = tpu.matmul %11, %12, %cst_13 {dimension_numbers = #tpu.dot_dimension_numbers<[1], [0], [0], [1], [0, 0, 1, 1], [], []>} : vector<16x64xf32>, vector<64x128xf32>, vector<16x128xf32> -> vector<16x128xf32>
    %c0_14 = arith.constant 0 : index
    %c0_15 = arith.constant 0 : index
    %14 = vector.load %arg7[%c0_14, %c0_15] : memref<1x128xf32, #tpu.memory_space<vmem>>, vector<1x128xf32>
    %15 = vector.broadcast %14 : vector<1x128xf32> to vector<16x128xf32>
    %16 = arith.addf %13, %15 : vector<16x128xf32>
    %c0_16 = arith.constant 0 : index
    %c0_17 = arith.constant 0 : index
    %17 = vector.load %arg8[%c0_16, %c0_17] : memref<16x128xf32, #tpu.memory_space<vmem>>, vector<16x128xf32>
    tpu.vector_store %arg8[%c0_16, %c0_17], %16 {strides = array<i32>} : memref<16x128xf32, #tpu.memory_space<vmem>>, vector<16x128xf32>,
    return
  }
  func.func @transform_0(%arg0: i32) -> (i32, i32) {
    %c0_i32 = arith.constant 0 : i32
    %c0_i32_0 = arith.constant 0 : i32
    return %arg0, %c0_i32 : i32, i32
  }
  func.func @transform_1(%arg0: i32) -> (i32, i32) {
    %c0_i32 = arith.constant 0 : i32
    %c0_i32_0 = arith.constant 0 : i32
    return %arg0, %c0_i32 : i32, i32
  }
  func.func @transform_2(%arg0: i32) -> (i32, i32) {
    %c0_i32 = arith.constant 0 : i32
    %c0_i32_0 = arith.constant 0 : i32
    %c0_i32_1 = arith.constant 0 : i32
    return %c0_i32, %c0_i32_0 : i32, i32
  }
  func.func @transform_3(%arg0: i32) -> (i32, i32) {
    %c0_i32 = arith.constant 0 : i32
    %c0_i32_0 = arith.constant 0 : i32
    %c0_i32_1 = arith.constant 0 : i32
    return %c0_i32, %c0_i32_0 : i32, i32
  }
  func.func @transform_4(%arg0: i32) -> (i32, i32) {
    %c0_i32 = arith.constant 0 : i32
    %c0_i32_0 = arith.constant 0 : i32
    %c0_i32_1 = arith.constant 0 : i32
    return %c0_i32, %c0_i32_0 : i32, i32
  }
  func.func @transform_5(%arg0: i32) -> (i32, i32) {
    %c0_i32 = arith.constant 0 : i32
    %c0_i32_0 = arith.constant 0 : i32
    %c0_i32_1 = arith.constant 0 : i32
    return %c0_i32, %c0_i32_0 : i32, i32
  }
  func.func @transform_6(%arg0: i32) -> (i32, i32) {
    %c0_i32 = arith.constant 0 : i32
    %c0_i32_0 = arith.constant 0 : i32
    %c0_i32_1 = arith.constant 0 : i32
    return %c0_i32, %c0_i32_0 : i32, i32
  }
  func.func @transform_7(%arg0: i32) -> (i32, i32) {
    %c0_i32 = arith.constant 0 : i32
    %c0_i32_0 = arith.constant 0 : i32
    return %arg0, %c0_i32 : i32, i32
  }
}

</mosaic_0001>

<llo_original>
// kernel: tpu_custom_call.1
$region0: #{tpu_custom_call.1}
  #allocation0 [shape = 'u32[]', space=smem, size = 0x4, offset = 0x4, fixed_abs, tag = 'smem constant byte address 0x4 - core index']
  #allocation1 [shape = 'u32[144,128]{1,0:T(1,128)}', space=vmem, size = 0x12000, scoped, tag = 'internal scratch']
  %s0 = inlined_call_operand.vmem [shape: bf16[48,36], index: 0, kind: input, shape index: {}]
  %s1 = inlined_call_operand.vmem [shape: bf16[48,36], index: 1, kind: input, shape index: {}]
  %s2 = inlined_call_operand.vmem [shape: bf16[36,64], index: 2, kind: input, shape index: {}]
  %s3 = inlined_call_operand.vmem [shape: bf16[36,64], index: 3, kind: input, shape index: {}]
  %s4 = inlined_call_operand.vmem [shape: f32[1,64], index: 4, kind: input, shape index: {}]
  %s5 = inlined_call_operand.vmem [shape: f32[64,128], index: 5, kind: input, shape index: {}]
  %s6 = inlined_call_operand.vmem [shape: f32[1,128], index: 6, kind: input, shape index: {}]
  %s7 = inlined_call_operand.hbm [shape: f32[48,128], index: 7, kind: output, shape index: {}]
  %s8 = sld [smem:[#allocation0]]
  $region61: #{tpu_custom_call.1} parent=0
    _
  %s10 = ssub.s32 1, %s8
  %s11 = scalar_select 0, %s10, %s8
  $region1: #{tpu_custom_call.1} parent=0
    #allocation2 [shape = 'u8[16384]{0}', space=vmem, size = 0x4000, scoped, tag = 'output window, operand 0']
    #allocation3 [shape = 's32[2]{0}', space=sflag, size = 0x8, scoped, tag = 'scoped memory for tpu_custom_call.1']
    %12 = vsyncpa [#allocation3], 0
    %s13 = scalar_lea.sflag [#allocation3], 1
    %14 = vsyncpa %s13, 0
    loop: start=0, step=1, limit=5
    $region2: #{tpu_custom_call.1} parent=1 // loop_pre_header
      _
    $region3: #{tpu_custom_call.1} parent=1 // loop_header
      %s16 = sphi 0, %s20
      %p17 = scmp.ge.s32.totalorder %s16, 5
      %s26 = sphi 0, %s28
      %s29 = sphi 0, %s26
      %s30 = sphi 0, %s29
      %s46 = sphi 0, %s30
      %s52 = sphi 0, %s54
      %s55 = sphi 0, %s52
      %s56 = sphi 0, %s55
      %s72 = sphi 0, %s56
      %s76 = sphi 0, %s76
      %s78 = sphi 0, %s76
      %s79 = sphi 0, %s78
      %s93 = sphi 0, %s79
      %s97 = sphi 0, %s97
      %s99 = sphi 0, %s97
      %s100 = sphi 0, %s99
      %s114 = sphi 0, %s100
      %s118 = sphi 0, %s118
      %s120 = sphi 0, %s118
      %s121 = sphi 0, %s120
      %s135 = sphi 0, %s121
      %s139 = sphi 0, %s139
      %s141 = sphi 0, %s139
      %s142 = sphi 0, %s141
      %s156 = sphi 0, %s142
      %s160 = sphi 0, %s160
      %s162 = sphi 0, %s160
      %s163 = sphi 0, %s162
      %s177 = sphi 0, %s163
      %s183 = sphi 0, %s185
      %s186 = sphi 0, %s183
      %s187 = sphi 0, %s186
      %s203 = sphi 0, %s187
    $region4: #{tpu_custom_call.1} parent=1 // loop_header_branch
      %19 = sbr.rel (%p17) target = $region8
    $region5: #{tpu_custom_call.1} parent=1 // loop_body
      %s21 = ssub.s32 %s16, 1
      %s22 = ssub.s32 %s16, 2
      %s23 = sadd.s32 %s16, 1
      %s24 = ssub.s32 %s16, %s23
      %p25 = scmp.eq.s32.totalorder %s24, 0
      %s27 = sadd.s32 %s26, 1
      %s28 = scalar_select %p25, %s26, %s27
      %p31 = pneg %p25
      %p32 = scmp.eq.s32.totalorder %s16, 2
      %p33 = por %p31, %p32
      %p34 = scmp.ne.s32.totalorder %s26, %s29
      %p35 = scmp.eq.s32.totalorder %s16, 0
      %p36 = por %p34, %p35
      %p37 = scmp.ne.s32.totalorder %s26, %s29
      %p38 = scmp.eq.s32.totalorder %s21, 2
      %p39 = por %p37, %p38
      %p40 = scmp.ne.s32.totalorder %s29, %s30
      %p41 = scmp.eq.s32.totalorder %s21, 0
      %p42 = por %p40, %p41
      %p43 = scmp.ne.s32.totalorder %s29, %s30
      %p44 = scmp.eq.s32.totalorder %s22, 2
      %p45 = por %p43, %p44
      %p47 = scmp.ne.s32.totalorder %s30, %s46
      %p48 = scmp.eq.s32.totalorder %s22, 0
      %p49 = por %p47, %p48
      %s50 = ssub.s32 %s16, %s23
      %p51 = scmp.eq.s32.totalorder %s50, 0
      %s53 = sadd.s32 %s52, 1
      %s54 = scalar_select %p51, %s52, %s53
      %p57 = pneg %p51
      %p58 = scmp.eq.s32.totalorder %s16, 2
      %p59 = por %p57, %p58
      %p60 = scmp.ne.s32.totalorder %s52, %s55
      %p61 = scmp.eq.s32.totalorder %s16, 0
      %p62 = por %p60, %p61
      %p63 = scmp.ne.s32.totalorder %s52, %s55
      %p64 = scmp.eq.s32.totalorder %s21, 2
      %p65 = por %p63, %p64
      %p66 = scmp.ne.s32.totalorder %s55, %s56
      %p67 = scmp.eq.s32.totalorder %s21, 0
      %p68 = por %p66, %p67
      %p69 = scmp.ne.s32.totalorder %s55, %s56
      %p70 = scmp.eq.s32.totalorder %s22, 2
      %p71 = por %p69, %p70
      %p73 = scmp.ne.s32.totalorder %s56, %s72
      %p74 = scmp.eq.s32.totalorder %s22, 0
      %p75 = por %p73, %p74
      %s77 = sadd.s32 %s76, 1
      %p80 = scmp.eq.s32.totalorder %s16, 2
      %p81 = scmp.ne.s32.totalorder %s76, %s78
      %p82 = scmp.eq.s32.totalorder %s16, 0
      %p83 = por %p81, %p82
      %p84 = scmp.ne.s32.totalorder %s76, %s78
      %p85 = scmp.eq.s32.totalorder %s21, 2
      %p86 = por %p84, %p85
      %p87 = scmp.ne.s32.totalorder %s78, %s79
      %p88 = scmp.eq.s32.totalorder %s21, 0
      %p89 = por %p87, %p88
      %p90 = scmp.ne.s32.totalorder %s78, %s79
      %p91 = scmp.eq.s32.totalorder %s22, 2
      %p92 = por %p90, %p91
      %p94 = scmp.ne.s32.totalorder %s79, %s93
      %p95 = scmp.eq.s32.totalorder %s22, 0
      %p96 = por %p94, %p95
      %s98 = sadd.s32 %s97, 1
      %p101 = scmp.eq.s32.totalorder %s16, 2
      %p102 = scmp.ne.s32.totalorder %s97, %s99
      %p103 = scmp.eq.s32.totalorder %s16, 0
      %p104 = por %p102, %p103
      %p105 = scmp.ne.s32.totalorder %s97, %s99
      %p106 = scmp.eq.s32.totalorder %s21, 2
      %p107 = por %p105, %p106
      %p108 = scmp.ne.s32.totalorder %s99, %s100
      %p109 = scmp.eq.s32.totalorder %s21, 0
      %p110 = por %p108, %p109
      %p111 = scmp.ne.s32.totalorder %s99, %s100
      %p112 = scmp.eq.s32.totalorder %s22, 2
      %p113 = por %p111, %p112
      %p115 = scmp.ne.s32.totalorder %s100, %s114
      %p116 = scmp.eq.s32.totalorder %s22, 0
      %p117 = por %p115, %p116
      %s119 = sadd.s32 %s118, 1
      %p122 = scmp.eq.s32.totalorder %s16, 2
      %p123 = scmp.ne.s32.totalorder %s118, %s120
      %p124 = scmp.eq.s32.totalorder %s16, 0
      %p125 = por %p123, %p124
      %p126 = scmp.ne.s32.totalorder %s118, %s120
      %p127 = scmp.eq.s32.totalorder %s21, 2
      %p128 = por %p126, %p127
      %p129 = scmp.ne.s32.totalorder %s120, %s121
      %p130 = scmp.eq.s32.totalorder %s21, 0
      %p131 = por %p129, %p130
      %p132 = scmp.ne.s32.totalorder %s120, %s121
      %p133 = scmp.eq.s32.totalorder %s22, 2
      %p134 = por %p132, %p133
      %p136 = scmp.ne.s32.totalorder %s121, %s135
      %p137 = scmp.eq.s32.totalorder %s22, 0
      %p138 = por %p136, %p137
      %s140 = sadd.s32 %s139, 1
      %p143 = scmp.eq.s32.totalorder %s16, 2
      %p144 = scmp.ne.s32.totalorder %s139, %s141
      %p145 = scmp.eq.s32.totalorder %s16, 0
      %p146 = por %p144, %p145
      %p147 = scmp.ne.s32.totalorder %s139, %s141
      %p148 = scmp.eq.s32.totalorder %s21, 2
      %p149 = por %p147, %p148
      %p150 = scmp.ne.s32.totalorder %s141, %s142
      %p151 = scmp.eq.s32.totalorder %s21, 0
      %p152 = por %p150, %p151
      %p153 = scmp.ne.s32.totalorder %s141, %s142
      %p154 = scmp.eq.s32.totalorder %s22, 2
      %p155 = por %p153, %p154
      %p157 = scmp.ne.s32.totalorder %s142, %s156
      %p158 = scmp.eq.s32.totalorder %s22, 0
      %p159 = por %p157, %p158
      %s161 = sadd.s32 %s160, 1
      %p164 = scmp.eq.s32.totalorder %s16, 2
      %p165 = scmp.ne.s32.totalorder %s160, %s162
      %p166 = scmp.eq.s32.totalorder %s16, 0
      %p167 = por %p165, %p166
      %p168 = scmp.ne.s32.totalorder %s160, %s162
      %p169 = scmp.eq.s32.totalorder %s21, 2
      %p170 = por %p168, %p169
      %p171 = scmp.ne.s32.totalorder %s162, %s163
      %p172 = scmp.eq.s32.totalorder %s21, 0
      %p173 = por %p171, %p172
      %p174 = scmp.ne.s32.totalorder %s162, %s163
      %p175 = scmp.eq.s32.totalorder %s22, 2
      %p176 = por %p174, %p175
      %p178 = scmp.ne.s32.totalorder %s163, %s177
      %p179 = scmp.eq.s32.totalorder %s22, 0
      %p180 = por %p178, %p179
      %s181 = ssub.s32 %s16, %s23
      %p182 = scmp.eq.s32.totalorder %s181, 0
      %s184 = sadd.s32 %s183, 1
      %s185 = scalar_select %p182, %s183, %s184
      %p188 = pneg %p182
      %p189 = scmp.eq.s32.totalorder %s16, 2
      %p190 = por %p188, %p189
      %p191 = scmp.ne.s32.totalorder %s183, %s186
      %p192 = scmp.eq.s32.totalorder %s16, 0
      %p193 = por %p191, %p192
      %p194 = scmp.ne.s32.totalorder %s183, %s186
      %p195 = scmp.eq.s32.totalorder %s21, 2
      %p196 = por %p194, %p195
      %p197 = scmp.ne.s32.totalorder %s186, %s187
      %p198 = scmp.eq.s32.totalorder %s21, 0
      %p199 = por %p197, %p198
      %p200 = scmp.ne.s32.totalorder %s186, %s187
      %p201 = scmp.eq.s32.totalorder %s22, 2
      %p202 = por %p200, %p201
      %p204 = scmp.ne.s32.totalorder %s187, %s203
      %p205 = scmp.eq.s32.totalorder %s22, 0
      %p206 = por %p204, %p205
      %p207 = scmp.le.s32.totalorder 1, %s16
      %p208 = scmp.lt.s32.totalorder %s16, 4
      %p209 = pnand %p207, %p208
      %p210 = pneg %p209
      // Predicated region
      $region9: #{tpu_custom_call.1} parent=5 // pred_check
        _
      $region10: #{tpu_custom_call.1} parent=5 // pred_check_branch
        %212 = sbr.rel (%p209) target = $region12
      $region11: #{tpu_custom_call.1} parent=5 // pred_region
        %s213 = ssub.s32 %s16, 1
        // Predicated region
        $region13: #{tpu_custom_call.1} parent=11 // pred_check
          %p214 = pneg %p89
        $region14: #{tpu_custom_call.1} parent=11 // pred_check_branch
          %216 = sbr.rel (%p214) target = $region16
        $region15: #{tpu_custom_call.1} parent=11 // pred_region
          _
        $region16: #{tpu_custom_call.1} parent=11 // pred_fallthru
          _
        // Predicated region
        $region17: #{tpu_custom_call.1} parent=11 // pred_check
          %p217 = pneg %p110
        $region18: #{tpu_custom_call.1} parent=11 // pred_check_branch
          %219 = sbr.rel (%p217) target = $region20
        $region19: #{tpu_custom_call.1} parent=11 // pred_region
          _
        $region20: #{tpu_custom_call.1} parent=11 // pred_fallthru
          _
        // Predicated region
        $region21: #{tpu_custom_call.1} parent=11 // pred_check
          %p220 = pneg %p131
        $region22: #{tpu_custom_call.1} parent=11 // pred_check_branch
          %222 = sbr.rel (%p220) target = $region24
        $region23: #{tpu_custom_call.1} parent=11 // pred_region
          _
        $region24: #{tpu_custom_call.1} parent=11 // pred_fallthru
          _
        // Predicated region
        $region25: #{tpu_custom_call.1} parent=11 // pred_check
          %p223 = pneg %p152
        $region26: #{tpu_custom_call.1} parent=11 // pred_check_branch
          %225 = sbr.rel (%p223) target = $region28
        $region27: #{tpu_custom_call.1} parent=11 // pred_region
          _
        $region28: #{tpu_custom_call.1} parent=11 // pred_fallthru
          _
        // Predicated region
        $region29: #{tpu_custom_call.1} parent=11 // pred_check
          %p226 = pneg %p173
        $region30: #{tpu_custom_call.1} parent=11 // pred_check_branch
          %228 = sbr.rel (%p226) target = $region32
        $region31: #{tpu_custom_call.1} parent=11 // pred_region
          _
        $region32: #{tpu_custom_call.1} parent=11 // pred_fallthru
          _
      $region12: #{tpu_custom_call.1} parent=5 // pred_fallthru
        _
      %p229 = scmp.lt.s32.totalorder %s16, 3
      // Predicated region
      $region33: #{tpu_custom_call.1} parent=5 // pred_check
        %p230 = pneg %p229
      $region34: #{tpu_custom_call.1} parent=5 // pred_check_branch
        %232 = sbr.rel (%p230) target = $region36
      $region35: #{tpu_custom_call.1} parent=5 // pred_region
        // Predicated region
        $region37: #{tpu_custom_call.1} parent=35 // pred_check
          %p233 = pneg %p36
        $region38: #{tpu_custom_call.1} parent=35 // pred_check_branch
          %235 = sbr.rel (%p233) target = $region40
        $region39: #{tpu_custom_call.1} parent=35 // pred_region
          %s236 = smul.u32 2, %s16
          %p237 = scmp.lt.s32.totalorder %s236, 5
          %s238 = scalar_select %p237, %s236, 5
          %s239 = smul.addr %s238, 4
          %s240 = scalar_lea.vmem %s0, %s239
          %s241 = smul.u32 2, %s16
        $region40: #{tpu_custom_call.1} parent=35 // pred_fallthru
          _
        // Predicated region
        $region41: #{tpu_custom_call.1} parent=35 // pred_check
          %p242 = pneg %p62
        $region42: #{tpu_custom_call.1} parent=35 // pred_check_branch
          %244 = sbr.rel (%p242) target = $region44
        $region43: #{tpu_custom_call.1} parent=35 // pred_region
          %s245 = smul.u32 2, %s16
          %p246 = scmp.lt.s32.totalorder %s245, 5
          %s247 = scalar_select %p246, %s245, 5
          %s248 = smul.addr %s247, 4
          %s249 = scalar_lea.vmem %s1, %s248
          %s250 = smul.u32 2, %s16
        $region44: #{tpu_custom_call.1} parent=35 // pred_fallthru
          _
      $region36: #{tpu_custom_call.1} parent=5 // pred_fallthru
        _
      %p251 = scmp.le.s32.totalorder 1, %s16
      %p252 = scmp.lt.s32.totalorder %s16, 4
      %p253 = pnand %p251, %p252
      %p254 = pneg %p253
      // Predicated region
      $region45: #{tpu_custom_call.1} parent=5 // pred_check
        _
      $region46: #{tpu_custom_call.1} parent=5 // pred_check_branch
        %256 = sbr.rel (%p253) target = $region48
      $region47: #{tpu_custom_call.1} parent=5 // pred_region
        %s257 = ssub.s32 %s16, 1
        %s258 = smul.u32 2, %s21
        %p259 = scmp.lt.s32.totalorder %s258, 5
        %s260 = scalar_select %p259, %s258, 5
        %s261 = smul.addr %s260, 4
        %s262 = scalar_lea.vmem %s0, %s261
        %p263 = pneg %p42
        %p264 = pneg %p39
        %s265 = smul.u32 2, %s21
        %p266 = scmp.lt.s32.totalorder %s265, 5
        %s267 = scalar_select %p266, %s265, 5
        %s268 = smul.addr %s267, 4
        %s269 = scalar_lea.vmem %s1, %s268
        %p270 = pneg %p68
        %p271 = pneg %p65
        %p272 = pneg %p89
        %p273 = pneg %p86
        %p274 = pneg %p110
        %p275 = pneg %p107
        %p276 = pneg %p131
        %p277 = pneg %p128
        %p278 = pneg %p152
        %p279 = pneg %p149
        %p280 = pneg %p173
        %p281 = pneg %p170
        %p282 = pneg %p199
        %p283 = pneg %p196
        %s284 = sand.u32 %s186, 1
        %s285 = scalar_lea.sflag [#allocation3], %s284
        %s286 = sand.u32 %s186, 1
        %s287 = smul.addr %s286, 16
        %s288 = scalar_lea.vmem [#allocation2], %s287
        %s289 = smul.u32 2, %s21
        %p290 = scmp.lt.s32.totalorder %s289, 5
        %s291 = scalar_select %p290, %s289, 5
        %s292 = smul.addr %s291, 4
        %s293 = scalar_lea.vmem %s0, %s292
        %s294 = smul.u32 2, %s21
        %s295 = smul.u32 2, %s21
        %p296 = scmp.lt.s32.totalorder %s295, 5
        %s297 = scalar_select %p296, %s295, 5
        %s298 = smul.addr %s297, 4
        %s299 = scalar_lea.vmem %s1, %s298
        %s300 = smul.u32 2, %s21
        %s301 = smul.u32 2, %s21
        %v303 = vld [vmem:[%s299] sm:$0xf]
        %v304 = vld [vmem:[%s299 + $0x4] sm:$0xf]
        %v305 = vld [vmem:[%s2] sm:$0xf]
        %v306 = vld [vmem:[%s2 + $0x4] sm:$0xf]
        %v307 = vld [vmem:[%s2 + $0x8] sm:$0xf]
        %v308 = vld [vmem:[%s2 + $0xc] sm:$0xf]
        %v309 = vld [vmem:[%s2 + $0x10] sm:$0x3]
        %v310 = vld [vmem:[%s293] sm:$0xf]
        %v311 = vld [vmem:[%s293 + $0x4] sm:$0xf]
        %v312 = vld [vmem:[%s3] sm:$0xf]
        %v313 = vld [vmem:[%s3 + $0x4] sm:$0xf]
        %v314 = vld [vmem:[%s3 + $0x8] sm:$0xf]
        %v315 = vld [vmem:[%s3 + $0xc] sm:$0xf]
        %v316 = vld [vmem:[%s3 + $0x10] sm:$0x3]
        %v319 = vunpack.c.l.b16 %v310
        %v320 = vunpack.c.l.b16 %v311
        %v321 = vpack.c.b16 %v320, %v319
        %v327 = vunpack.c.l.b16 %v312
        %v328 = vunpack.c.l.b16 %v313
        %v329 = vunpack.c.l.b16 %v314
        %v330 = vunpack.c.l.b16 %v315
        %v331 = vunpack.c.l.b16 %v316
        %v332 = vpack.c.b16 %v328, %v327
        %v333 = vpack.c.b16 %v330, %v329
        %v334 = vpack.c.b16 %v331, %v331
        %vm337 = vcmask 293888
        %v339 = vsel %vm337, %v321, 0
        %vm341 = vcmask 1041408
        %v343 = vsel %vm341, %v334, 0
        %345 = vmatprep.subr.bf16.mxu0 0
        %346 = vmatpush1.bf16.msra.mxu0 %v332
        %347 = vmatprep.subr.bf16.mxu0 0
        %348 = vmatpush1.bf16.msra.mxu0 %v333
        %349 = vmatprep.subr.bf16.mxu0 0
        %350 = vmatpush1.bf16.msra.mxu0 %v343
        %351 = vmatprep.subr.bf16.mxu0 0
        %352 = vmatpush1.bf16.msra.mxu0 0
        %353 = vmatprep.subr.bf16.mxu0 0
        %354 = vmatpush1.bf16.msra.mxu0 0
        %355 = vmatprep.subr.bf16.mxu0 0
        %356 = vmatpush1.bf16.msra.mxu0 0
        %357 = vmatprep.subr.bf16.mxu0 0
        %358 = vmatpush1.bf16.msra.mxu0 0
        %359 = vmatprep.subr.bf16.mxu0 0
        %360 = vmatpush1.bf16.msra.mxu0 0
        %361 = vmatprep.subr.bf16.mxu0 0
        %362 = vmatpush1.bf16.msra.mxu0 0
        %363 = vmatprep.subr.bf16.mxu0 0
        %364 = vmatpush1.bf16.msra.mxu0 0
        %365 = vmatprep.subr.bf16.mxu0 0
        %366 = vmatpush1.bf16.msra.mxu0 0
        %367 = vmatprep.subr.bf16.mxu0 0
        %368 = vmatpush1.bf16.msra.mxu0 0
        %369 = vmatprep.subr.bf16.mxu0 0
        %370 = vmatpush1.bf16.msra.mxu0 0
        %371 = vmatprep.subr.bf16.mxu0 0
        %372 = vmatpush1.bf16.msra.mxu0 0
        %373 = vmatprep.subr.bf16.mxu0 0
        %374 = vmatpush1.bf16.msra.mxu0 0
        %375 = vmatprep.subr.bf16.mxu0 0
        %376 = vmatpush1.bf16.msra.mxu0 0
        %377 = vmatprep.mubr.bf16.mxu0 0
        %378 = vmatmul.mubr.bf16.gmra.mrb[0].mxu0 %v339
        %v379 = vpop.f32.mrb[0].mxu0
        %v380 = vadd.f32 0.0, %v379
        %v381 = vpop.f32.mrb[0].mxu0
        %v382 = vpop.f32.mrb[0].mxu0
        %v383 = vadd.f32 0.0, %v382
        %v384 = vpop.f32.mrb[0].mxu0
        %385 = vdwg.mxu0
        %v388 = vunpack.c.l.b16 %v303
        %v389 = vunpack.c.l.b16 %v304
        %v390 = vpack.c.b16 %v389, %v388
        %v396 = vunpack.c.l.b16 %v305
        %v397 = vunpack.c.l.b16 %v306
        %v398 = vunpack.c.l.b16 %v307
        %v399 = vunpack.c.l.b16 %v308
        %v400 = vunpack.c.l.b16 %v309
        %v401 = vpack.c.b16 %v397, %v396
        %v402 = vpack.c.b16 %v399, %v398
        %v403 = vpack.c.b16 %v400, %v400
        %v407 = vsel %vm337, %v390, 0
        %v410 = vsel %vm341, %v403, 0
        %412 = vmatprep.subr.bf16.mxu0 0
        %413 = vmatpush1.bf16.msra.mxu0 %v401
        %414 = vmatprep.subr.bf16.mxu0 0
        %415 = vmatpush1.bf16.msra.mxu0 %v402
        %416 = vmatprep.subr.bf16.mxu0 0
        %417 = vmatpush1.bf16.msra.mxu0 %v410
        %418 = vmatprep.subr.bf16.mxu0 0
        %419 = vmatpush1.bf16.msra.mxu0 0
        %420 = vmatprep.subr.bf16.mxu0 0
        %421 = vmatpush1.bf16.msra.mxu0 0
        %422 = vmatprep.subr.bf16.mxu0 0
        %423 = vmatpush1.bf16.msra.mxu0 0
        %424 = vmatprep.subr.bf16.mxu0 0
        %425 = vmatpush1.bf16.msra.mxu0 0
        %426 = vmatprep.subr.bf16.mxu0 0
        %427 = vmatpush1.bf16.msra.mxu0 0
        %428 = vmatprep.subr.bf16.mxu0 0
        %429 = vmatpush1.bf16.msra.mxu0 0
        %430 = vmatprep.subr.bf16.mxu0 0
        %431 = vmatpush1.bf16.msra.mxu0 0
        %432 = vmatprep.subr.bf16.mxu0 0
        %433 = vmatpush1.bf16.msra.mxu0 0
        %434 = vmatprep.subr.bf16.mxu0 0
        %435 = vmatpush1.bf16.msra.mxu0 0
        %436 = vmatprep.subr.bf16.mxu0 0
        %437 = vmatpush1.bf16.msra.mxu0 0
        %438 = vmatprep.subr.bf16.mxu0 0
        %439 = vmatpush1.bf16.msra.mxu0 0
        %440 = vmatprep.subr.bf16.mxu0 0
        %441 = vmatpush1.bf16.msra.mxu0 0
        %442 = vmatprep.subr.bf16.mxu0 0
        %443 = vmatpush1.bf16.msra.mxu0 0
        %444 = vmatprep.mubr.bf16.mxu0 0
        %445 = vmatmul.mubr.bf16.gmra.mrb[0].mxu0 %v407
        %v446 = vpop.f32.mrb[0].mxu0
        %v447 = vadd.f32 %v380, %v446
        %v448 = vpop.f32.mrb[0].mxu0
        %v449 = vpop.f32.mrb[0].mxu0
        %v450 = vadd.f32 %v383, %v449
        %v451 = vpop.f32.mrb[0].mxu0
        %452 = vdwg.mxu0
        %v453 = vld [vmem:[%s4] sm:$0x1]
        %v455 = vlaneseq
        %v456 = vshrl.u32 %v455, 7
        %v457 = vsub.s32 0, %v456
        %v458 = vrot.slane %v453, %v457
        %v460 = vadd.f32 %v447, %v458
        %v461 = vadd.f32 %v450, %v458
        %v462 = vmax.f32 %v460, 0.0
        %v463 = vmax.f32 %v461, 0.0
        %v464 = vld [vmem:[%s5] sm:$0xff]
        %v465 = vld [vmem:[%s5 + $0x8] sm:$0xff]
        %v466 = vld [vmem:[%s5 + $0x10] sm:$0xff]
        %v467 = vld [vmem:[%s5 + $0x18] sm:$0xff]
        %v468 = vld [vmem:[%s5 + $0x20] sm:$0xff]
        %v469 = vld [vmem:[%s5 + $0x28] sm:$0xff]
        %v470 = vld [vmem:[%s5 + $0x30] sm:$0xff]
        %v471 = vld [vmem:[%s5 + $0x38] sm:$0xff]
        %v472 = vld [vmem:[%s6] sm:$0x1]
        %v474 = vlaneseq
        %v475 = vshrl.u32 %v474, 7
        %v476 = vsub.s32 0, %v475
        %v477 = vrot.slane %v472, %v476
        %vm479 = vcmask 523264
        %v481 = vsel %vm479, %v462, 0
        %v484 = vsel %vm479, %v463, 0
        %486 = vmatprep.subr.mxu0 0.0
        %487 = vmatpush1.msra.mxu0 %v464
        %488 = vmatprep.subr.mxu0 0.0
        %489 = vmatpush1.msra.mxu0 %v465
        %490 = vmatprep.subr.mxu0 0.0
        %491 = vmatpush1.msra.mxu0 %v466
        %492 = vmatprep.subr.mxu0 0.0
        %493 = vmatpush1.msra.mxu0 %v467
        %494 = vmatprep.subr.mxu0 0.0
        %495 = vmatpush1.msra.mxu0 %v468
        %496 = vmatprep.subr.mxu0 0.0
        %497 = vmatpush1.msra.mxu0 %v469
        %498 = vmatprep.subr.mxu0 0.0
        %499 = vmatpush1.msra.mxu0 %v470
        %500 = vmatprep.subr.mxu0 0.0
        %501 = vmatpush1.msra.mxu0 %v471
        %502 = vmatprep.subr.mxu0 0.0
        %503 = vmatpush1.msra.mxu0 0.0
        %504 = vmatprep.subr.mxu0 0.0
        %505 = vmatpush1.msra.mxu0 0.0
        %506 = vmatprep.subr.mxu0 0.0
        %507 = vmatpush1.msra.mxu0 0.0
        %508 = vmatprep.subr.mxu0 0.0
        %509 = vmatpush1.msra.mxu0 0.0
        %510 = vmatprep.subr.mxu0 0.0
        %511 = vmatpush1.msra.mxu0 0.0
        %512 = vmatprep.subr.mxu0 0.0
        %513 = vmatpush1.msra.mxu0 0.0
        %514 = vmatprep.subr.mxu0 0.0
        %515 = vmatpush1.msra.mxu0 0.0
        %516 = vmatprep.subr.mxu0 0.0
        %517 = vmatpush1.msra.mxu0 0.0
        %518 = vmatprep.subr.mxu0 0.0
        %519 = vmatpush1.msra.mxu0 0.0
        %520 = vmatprep.subr.mxu0 0.0
        %521 = vmatpush1.msra.mxu0 0.0
        %522 = vmatprep.subr.mxu0 0.0
        %523 = vmatpush1.msra.mxu0 0.0
        %524 = vmatprep.subr.mxu0 0.0
        %525 = vmatpush1.msra.mxu0 0.0
        %526 = vmatprep.subr.mxu0 0.0
        %527 = vmatpush1.msra.mxu0 0.0
        %528 = vmatprep.subr.mxu0 0.0
        %529 = vmatpush1.msra.mxu0 0.0
        %530 = vmatprep.subr.mxu0 0.0
        %531 = vmatpush1.msra.mxu0 0.0
        %532 = vmatprep.subr.mxu0 0.0
        %533 = vmatpush1.msra.mxu0 0.0
        %534 = vmatprep.subr.mxu0 0.0
        %535 = vmatpush1.msra.mxu0 0.0
        %536 = vmatprep.subr.mxu0 0.0
        %537 = vmatpush1.msra.mxu0 0.0
        %538 = vmatprep.subr.mxu0 0.0
        %539 = vmatpush1.msra.mxu0 0.0
        %540 = vmatprep.subr.mxu0 0.0
        %541 = vmatpush1.msra.mxu0 0.0
        %542 = vmatprep.subr.mxu0 0.0
        %543 = vmatpush1.msra.mxu0 0.0
        %544 = vmatprep.subr.mxu0 0.0
        %545 = vmatpush1.msra.mxu0 0.0
        %546 = vmatprep.subr.mxu0 0.0
        %547 = vmatpush1.msra.mxu0 0.0
        %548 = vmatprep.subr.mxu0 0.0
        %549 = vmatpush1.msra.mxu0 0.0
        %550 = vmatprep.mubr.f32.mxu0 0.0
        %551 = vmatmul.mubr.f32.gmra.mrb[0].mxu0 %v481
        %v552 = vpop.f32.mrb[0].mxu0
        %v553 = vadd.f32 %v477, %v552
        %v554 = vpop.f32.mrb[0].mxu0
        %555 = vmatprep.mubr.f32.mxu0 0.0
        %556 = vmatmul.mubr.f32.gmra.mrb[0].mxu0 %v484
        %v557 = vpop.f32.mrb[0].mxu0
        %v558 = vadd.f32 %v477, %v557
        %v559 = vpop.f32.mrb[0].mxu0
        %560 = vdwg.mxu0
        %561 = vst [vmem:[%s288] sm:$0xff] %v553
        %562 = vst [vmem:[%s288 + $0x8] sm:$0xff] %v558
        %s563 = sand.u32 %s186, 1
        %s564 = scalar_lea.sflag [#allocation3], %s563
        %s565 = sand.u32 %s186, 1
        %s566 = smul.addr %s565, 16
        %s567 = scalar_lea.vmem [#allocation2], %s566
        // Predicated region
        $region49: #{tpu_custom_call.1} parent=47 // pred_check
          %p568 = pneg %p196
        $region50: #{tpu_custom_call.1} parent=47 // pred_check_branch
          %570 = sbr.rel (%p568) target = $region52
        $region51: #{tpu_custom_call.1} parent=47 // pred_region
          %s571 = smul.u32 2, %s21
          %s573 = ssub.s32 256, 256
          %574 = vsyncadd %s564, %s573
          %s575 = smul.addr %s571, 128
          %s576 = scalar_lea.hbm %s7, %s575
          %s577 = sshll.u32 %s567, 4
          %s578 = int_to_ptr.vmem [resolvable:$true] %s577
          %583 = dma.vmem_to_hbm [thread:$0]  %s578, 256, %s576, %s564, 128, 128, 8
        $region52: #{tpu_custom_call.1} parent=47 // pred_fallthru
          _
      $region48: #{tpu_custom_call.1} parent=5 // pred_fallthru
        _
      %p584 = scmp.le.s32.totalorder 2, %s16
      // Predicated region
      $region53: #{tpu_custom_call.1} parent=5 // pred_check
        %p585 = pneg %p584
      $region54: #{tpu_custom_call.1} parent=5 // pred_check_branch
        %587 = sbr.rel (%p585) target = $region56
      $region55: #{tpu_custom_call.1} parent=5 // pred_region
        %s588 = ssub.s32 %s16, 2
        // Predicated region
        $region57: #{tpu_custom_call.1} parent=55 // pred_check
          %p589 = pneg %p202
        $region58: #{tpu_custom_call.1} parent=55 // pred_check_branch
          %591 = sbr.rel (%p589) target = $region60
        $region59: #{tpu_custom_call.1} parent=55 // pred_region
          %s592 = sand.u32 %s187, 1
          %s593 = scalar_lea.sflag [#allocation3], %s592
          %s594 = sand.u32 %s187, 1
          %s595 = smul.addr %s594, 16
          %s596 = scalar_lea.vmem [#allocation2], %s595
          %597 = dma.done %s593, 256
        $region60: #{tpu_custom_call.1} parent=55 // pred_fallthru
          _
      $region56: #{tpu_custom_call.1} parent=5 // pred_fallthru
        _
    $region6: #{tpu_custom_call.1} parent=1 // loop_footer
      %s20 = sadd.s32 1, %s16
    $region7: #{tpu_custom_call.1} parent=1 // loop_footer_branch
      %15 = sbr.rel target = $region3
    $region8: #{tpu_custom_call.1} parent=1 // loop_exit
      _
    %598 = vsyncpa [#allocation3], 1
    %s599 = scalar_lea.sflag [#allocation3], 1
    %600 = vsyncpa %s599, 1

</llo_original>
